<compile_context>
chip_gen: v6e
topology: v6e:2x2x1
jax: 0.10.0
libtpu: 0.0.40
codegen_flags: <defaults>
</compile_context>

<pallas_src>
import numpy as np
import jax
import jax.numpy as jnp
from jax import lax
from jax.experimental import pallas as pl
from jax.experimental.pallas import tpu as pltpu


# ----------------------------- config (small, synthetic) -----------------------------
N_VOCAB = 50
EMBED = 32
NUM_FILTERS = 16
FILTER_SIZES = (2, 3, 4)
NUM_CLASSES = 5
BATCH = 2
SEQ_LEN = 8

K_MAX = max(FILTER_SIZES)                       # 4
NF_TOTAL = NUM_FILTERS * len(FILTER_SIZES)      # 48
NF_PAD = 64                                     # filter columns padded to 64 (zero cols)
N_VOCAB_PAD = 64                                # per-tap vocab block padded to 64
KCOLS = K_MAX * N_VOCAB_PAD                     # 256 lanes (2 lane tiles)
BL = BATCH * SEQ_LEN                            # 16 rows (2 sublane tiles)


def textcnn_kernel(shifted_ref,   # VMEM (BL, K_MAX) int32: global one-hot column per (row, tap); -1 = invalid
                   m_ref,         # VMEM (KCOLS, NF_PAD): fused (embedding @ conv weight) matrix
                   b_ref,         # VMEM (1, NF_PAD): fused conv bias (zero in pad columns)
                   mask_ref,      # VMEM (BL, NF_PAD): time-validity mask (1.0 valid / 0.0 invalid)
                   wfc_ref,       # VMEM (NF_PAD, C): pre-transposed, zero-row-padded fc weight
                   bfc_ref,       # VMEM (1, C): fc bias
                   out_ref):      # VMEM (B, C)
    # ---- one-hot patch matrix from shifted ids: pure iota/compare, no gather ---------
    col = lax.broadcasted_iota(jnp.int32, (BL, KCOLS), 1)
    sh = shifted_ref[...]                                  # (BL, K_MAX)
    hit = col == sh[:, 0:1]
    for j in range(1, K_MAX):
        hit = jnp.logical_or(hit, col == sh[:, j:j + 1])
    onehot = hit.astype(jnp.float32)                       # (BL, KCOLS)

    # ---- single fused embedding+conv matmul for all filter sizes / taps (one MXU pass)
    conv = jnp.dot(onehot, m_ref[...], preferred_element_type=jnp.float32)  # (BL, NF_PAD)
    conv = jnp.maximum(conv + b_ref[...], 0.0) * mask_ref[...]  # bias + ReLU + validity mask

    # ---- max-over-time per batch (static, sublane-tile-aligned slices) ---------------
    feat = jnp.concatenate(
        [jnp.max(conv[b * SEQ_LEN:(b + 1) * SEQ_LEN, :], axis=0, keepdims=True)
         for b in range(BATCH)], axis=0)                   # (B, NF_PAD)

    # Dropout: identity (inference).  Pad rows of the fc weight are zero -> padding inert.
    out = jnp.dot(feat, wfc_ref[...], preferred_element_type=jnp.float32) + bfc_ref[...]
    out_ref[...] = out.astype(out_ref.dtype)


@jax.jit
def textcnn_forward(token_ids, packed):
    m_all, b_all, mask, wfc_t, bfc = packed

    # Shifted target columns (B*L, K_MAX): column j*N_VOCAB_PAD + ids[b, l+j] if l+j < L,
    # else -1 (never matches -> that tap contributes nothing).  Tiny XLA index math,
    # fused ahead of the pallas_call.
    cols = []
    for j in range(K_MAX):
        c = jnp.full((BATCH, SEQ_LEN), -1, jnp.int32)
        c = c.at[:, :SEQ_LEN - j].set(token_ids[:, j:] + j * N_VOCAB_PAD)
        cols.append(c.reshape(BL, 1))
    shifted_cols = jnp.concatenate(cols, axis=1)           # (BL, K_MAX) int32

    vmem = pl.BlockSpec(memory_space=pltpu.MemorySpace.VMEM)
    return pl.pallas_call(
        textcnn_kernel,
        out_shape=jax.ShapeDtypeStruct((BATCH, NUM_CLASSES), jnp.float32),
        in_specs=[vmem, vmem, vmem, vmem, vmem, vmem],
        out_specs=vmem,
    )(shifted_cols, m_all, b_all, mask, wfc_t, bfc)


def init_params(key):
    """Deterministic synthetic init matching the PyTorch module's parameter shapes."""
    keys = jax.random.split(key, 1 + 2 * len(FILTER_SIZES) + 2)
    ki = iter(keys)

    # Embedding table (n_vocab, embed); padding_idx row (last) zeroed like nn.Embedding.
    emb_table = jax.random.normal(next(ki), (N_VOCAB, EMBED), jnp.float32) * 0.1
    emb_table = emb_table.at[N_VOCAB - 1].set(0.0)

    convs = []
    for k in FILTER_SIZES:
        # PyTorch Conv2d weight layout: (F, 1, k, E)
        w = jax.random.normal(next(ki), (NUM_FILTERS, 1, k, EMBED), jnp.float32) * 0.1
        b = jax.random.normal(next(ki), (1, NUM_FILTERS), jnp.float32) * 0.1
        convs.append((w, b))

    fc_in = NUM_FILTERS * len(FILTER_SIZES)
    wfc = jax.random.normal(next(ki), (NUM_CLASSES, fc_in), jnp.float32) * 0.1
    bfc = jax.random.normal(next(ki), (1, NUM_CLASSES), jnp.float32) * 0.1
    return emb_table, {"convs": convs, "fc": (wfc, bfc)}


def pack_params(emb_table, params):
    """Wrapper-side layout plumbing: fold embedding into conv weights, pad to clean lanes,
    precompute the time-validity mask, pre-transpose + zero-pad the FC weight."""
    emb_pad = jnp.zeros((N_VOCAB_PAD, EMBED), jnp.float32).at[:N_VOCAB].set(emb_table)

    m_all = jnp.zeros((KCOLS, NF_PAD), jnp.float32)
    b_all = jnp.zeros((1, NF_PAD), jnp.float32)
    c0 = 0
    for k, (w, b) in zip(FILTER_SIZES, params["convs"]):
        for j in range(k):
            mj = emb_pad @ w[:, 0, j, :].T                 # (N_VOCAB_PAD, F)
            m_all = m_all.at[j * N_VOCAB_PAD:(j + 1) * N_VOCAB_PAD,
                             c0:c0 + NUM_FILTERS].set(mj)
        b_all = b_all.at[:, c0:c0 + NUM_FILTERS].set(b)
        c0 += NUM_FILTERS

    # Time-validity mask (B*L, NF_PAD): position l valid for filter size k iff l <= L - k.
    mask_np = np.zeros((BL, NF_PAD), np.float32)
    c0 = 0
    for k in FILTER_SIZES:
        for b in range(BATCH):
            mask_np[b * SEQ_LEN:b * SEQ_LEN + (SEQ_LEN - k + 1), c0:c0 + NUM_FILTERS] = 1.0
        c0 += NUM_FILTERS
    mask = jnp.asarray(mask_np)

    wfc, bfc = params["fc"]
    wfc_t = jnp.zeros((NF_PAD, NUM_CLASSES), jnp.float32).at[:NF_TOTAL].set(wfc.T)
    return (m_all, b_all, mask, wfc_t, bfc)


def reference_forward(token_ids, emb_table, params):
    """Pure-JAX reference of the PyTorch forward (eval mode), from the unfused params."""
    emb = jnp.take(emb_table, token_ids, axis=0)           # (B, L, E)
    pooled = []
    for k, (w, b) in zip(FILTER_SIZES, params["convs"]):
        w_kef = jnp.transpose(w[:, 0, :, :], (1, 2, 0))    # (k, E, F)
        Lk = emb.shape[1] - k + 1
        acc = jnp.zeros((emb.shape[0], Lk, NUM_FILTERS), jnp.float32)
        for j in range(k):
            acc = acc + jnp.einsum('ble,ef->blf', emb[:, j:j + Lk, :], w_kef[j])
        conv = jax.nn.relu(acc + b[0][None, None, :])
        pooled.append(jnp.max(conv, axis=1))
    feat = jnp.concatenate(pooled, axis=-1)
    wfc, bfc = params["fc"]
    return feat @ wfc.T + bfc[0][None, :]


if __name__ == "__main__":
    key = jax.random.PRNGKey(0)
    k_param, k_ids = jax.random.split(key)

    emb_table, params = init_params(k_param)
    packed = pack_params(emb_table, params)

    # x[0] in the PyTorch forward: token ids of shape (batch, seq_len)
    token_ids = jax.random.randint(k_ids, (BATCH, SEQ_LEN), 0, N_VOCAB, dtype=jnp.int32)

    out = textcnn_forward(token_ids, packed)
    out = jax.block_until_ready(out)

    ref = reference_forward(token_ids, emb_table, params)
    assert out.shape == (BATCH, NUM_CLASSES)
    assert jnp.allclose(out, ref, atol=1e-5, rtol=1e-5), "mismatch vs JAX reference"

    print("KERNEL_OK")
</pallas_src>

<mosaic_0001>
module attributes {stable_mosaic.version = 11 : i64} {
  func.func @textcnn_kernel(%arg0: memref<16x4xi32, #tpu.memory_space<vmem>>, %arg1: memref<256x64xf32, #tpu.memory_space<vmem>>, %arg2: memref<1x64xf32, #tpu.memory_space<vmem>>, %arg3: memref<16x64xf32, #tpu.memory_space<vmem>>, %arg4: memref<64x5xf32, #tpu.memory_space<vmem>>, %arg5: memref<1x5xf32, #tpu.memory_space<vmem>>, %arg6: memref<2x5xf32, #tpu.memory_space<vmem>>) attributes {dimension_semantics = [], scalar_prefetch = 0 : i64, scratch_operands = 0 : i64, tpu.core_type = #tpu.core_type<tc>} {
    %0 = tpu.iota {dimensions = array<i32: 1>} : vector<16x256xi32>
    %c0 = arith.constant 0 : index
    %c0_0 = arith.constant 0 : index
    %1 = vector.load %arg0[%c0, %c0_0] : memref<16x4xi32, #tpu.memory_space<vmem>>, vector<16x4xi32>
    %2 = vector.extract_strided_slice %1 {offsets = [0, 0], sizes = [16, 1], strides = [1, 1]} : vector<16x4xi32> to vector<16x1xi32>
    %3 = vector.broadcast %2 : vector<16x1xi32> to vector<16x256xi32>
    %4 = arith.cmpi eq, %0, %3 : vector<16x256xi32>
    %5 = vector.extract_strided_slice %1 {offsets = [0, 1], sizes = [16, 1], strides = [1, 1]} : vector<16x4xi32> to vector<16x1xi32>
    %6 = vector.broadcast %5 : vector<16x1xi32> to vector<16x256xi32>
    %7 = arith.cmpi eq, %0, %6 : vector<16x256xi32>
    %8 = arith.ori %4, %7 : vector<16x256xi1>
    %9 = vector.extract_strided_slice %1 {offsets = [0, 2], sizes = [16, 1], strides = [1, 1]} : vector<16x4xi32> to vector<16x1xi32>
    %10 = vector.broadcast %9 : vector<16x1xi32> to vector<16x256xi32>
    %11 = arith.cmpi eq, %0, %10 : vector<16x256xi32>
    %12 = arith.ori %8, %11 : vector<16x256xi1>
    %13 = vector.extract_strided_slice %1 {offsets = [0, 3], sizes = [16, 1], strides = [1, 1]} : vector<16x4xi32> to vector<16x1xi32>
    %14 = vector.broadcast %13 : vector<16x1xi32> to vector<16x256xi32>
    %15 = arith.cmpi eq, %0, %14 : vector<16x256xi32>
    %16 = arith.ori %12, %15 : vector<16x256xi1>
    %17 = arith.extui %16 : vector<16x256xi1> to vector<16x256xi32>
    %18 = arith.sitofp %17 : vector<16x256xi32> to vector<16x256xf32>
    %c0_1 = arith.constant 0 : index
    %c0_2 = arith.constant 0 : index
    %19 = vector.load %arg1[%c0_1, %c0_2] : memref<256x64xf32, #tpu.memory_space<vmem>>, vector<256x64xf32>
    %cst = arith.constant dense<0.000000e+00> : vector<16x64xf32>
    %20 = tpu.matmul %18, %19, %cst {dimension_numbers = #tpu.dot_dimension_numbers<[1], [0], [0], [1], [0, 0, 1, 1], [], []>} : vector<16x256xf32>, vector<256x64xf32>, vector<16x64xf32> -> vector<16x64xf32>
    %c0_3 = arith.constant 0 : index
    %c0_4 = arith.constant 0 : index
    %21 = vector.load %arg2[%c0_3, %c0_4] : memref<1x64xf32, #tpu.memory_space<vmem>>, vector<1x64xf32>
    %22 = vector.broadcast %21 : vector<1x64xf32> to vector<16x64xf32>
    %23 = arith.addf %20, %22 : vector<16x64xf32>
    %cst_5 = arith.constant 0.000000e+00 : f32
    %24 = vector.broadcast %cst_5 : f32 to vector<16x64xf32>
    %25 = arith.maximumf %23, %24 : vector<16x64xf32>
    %c0_6 = arith.constant 0 : index
    %c0_7 = arith.constant 0 : index
    %26 = vector.load %arg3[%c0_6, %c0_7] : memref<16x64xf32, #tpu.memory_space<vmem>>, vector<16x64xf32>
    %27 = arith.mulf %25, %26 : vector<16x64xf32>
    %28 = vector.extract_strided_slice %27 {offsets = [0, 0], sizes = [8, 64], strides = [1, 1]} : vector<16x64xf32> to vector<8x64xf32>
    %cst_8 = arith.constant dense<0xFF800000> : vector<64xf32>
    %29 = vector.multi_reduction <maximumf>, %28, %cst_8 [0] : vector<8x64xf32> to vector<64xf32>
    %30 = vector.shape_cast %29 : vector<64xf32> to vector<1x64xf32>
    %31 = vector.extract_strided_slice %27 {offsets = [8, 0], sizes = [8, 64], strides = [1, 1]} : vector<16x64xf32> to vector<8x64xf32>
    %cst_9 = arith.constant dense<0xFF800000> : vector<64xf32>
    %32 = vector.multi_reduction <maximumf>, %31, %cst_9 [0] : vector<8x64xf32> to vector<64xf32>
    %33 = vector.shape_cast %32 : vector<64xf32> to vector<1x64xf32>
    %34 = tpu.concatenate %30, %33 in 0 : vector<1x64xf32>, vector<1x64xf32> -> vector<2x64xf32>
    %c0_10 = arith.constant 0 : index
    %c0_11 = arith.constant 0 : index
    %35 = vector.load %arg4[%c0_10, %c0_11] : memref<64x5xf32, #tpu.memory_space<vmem>>, vector<64x5xf32>
    %cst_12 = arith.constant dense<0.000000e+00> : vector<2x5xf32>
    %36 = tpu.matmul %34, %35, %cst_12 {dimension_numbers = #tpu.dot_dimension_numbers<[1], [0], [0], [1], [0, 0, 1, 1], [], []>} : vector<2x64xf32>, vector<64x5xf32>, vector<2x5xf32> -> vector<2x5xf32>
    %c0_13 = arith.constant 0 : index
    %c0_14 = arith.constant 0 : index
    %37 = vector.load %arg5[%c0_13, %c0_14] : memref<1x5xf32, #tpu.memory_space<vmem>>, vector<1x5xf32>
    %38 = vector.broadcast %37 : vector<1x5xf32> to vector<2x5xf32>
    %39 = arith.addf %36, %38 : vector<2x5xf32>
    %c0_15 = arith.constant 0 : index
    %c0_16 = arith.constant 0 : index
    %40 = vector.load %arg6[%c0_15, %c0_16] : memref<2x5xf32, #tpu.memory_space<vmem>>, vector<2x5xf32>
    tpu.vector_store %arg6[%c0_15, %c0_16], %39 {strides = array<i32>} : memref<2x5xf32, #tpu.memory_space<vmem>>, vector<2x5xf32>,
    return
  }
}

</mosaic_0001>

<llo_original>
// kernel: textcnn_forward.1
$region0: #{textcnn_forward.1}
  #allocation0 [shape = 'u32[]', space=smem, size = 0x4, offset = 0x4, fixed_abs, tag = 'smem constant byte address 0x4 - core index']
  #allocation1 [shape = 'u32[144,128]{1,0:T(1,128)}', space=vmem, size = 0x12000, scoped, tag = 'internal scratch']
  %s0 = inlined_call_operand.vmem [shape: s32[16,4], index: 0, kind: input, shape index: {}]
  %s1 = inlined_call_operand.vmem [shape: f32[256,64], index: 1, kind: input, shape index: {}]
  %s2 = inlined_call_operand.vmem [shape: f32[1,64], index: 2, kind: input, shape index: {}]
  %s3 = inlined_call_operand.vmem [shape: f32[16,64], index: 3, kind: input, shape index: {}]
  %s4 = inlined_call_operand.vmem [shape: f32[64,5], index: 4, kind: input, shape index: {}]
  %s5 = inlined_call_operand.vmem [shape: f32[1,5], index: 5, kind: input, shape index: {}]
  %s6 = inlined_call_operand.hbm [shape: f32[2,5], index: 6, kind: output, shape index: {}]
  %s7 = sld [smem:[#allocation0]]
  $region34: #{textcnn_forward.1} parent=0
    _
  %s9 = ssub.s32 1, %s7
  %s10 = scalar_select 0, %s9, %s7
  $region1: #{textcnn_forward.1} parent=0
    #allocation2 [shape = 'u8[1024]{0}', space=vmem, size = 0x400, scoped, tag = 'output window, operand 0, single buffered']
    #allocation3 [shape = 's32[1]{0}', space=sflag, size = 0x4, scoped, tag = 'scoped memory for textcnn_forward.1']
    %11 = vsyncpa [#allocation3], 0
    // Predicated region
    $region2: #{textcnn_forward.1} parent=1 // pred_check
      _
    $region3: #{textcnn_forward.1} parent=1 // pred_check_branch
      %13 = sbr.rel (0) target = $region5
    $region4: #{textcnn_forward.1} parent=1 // pred_region
      _
    $region5: #{textcnn_forward.1} parent=1 // pred_fallthru
      _
    // Predicated region
    $region6: #{textcnn_forward.1} parent=1 // pred_check
      _
    $region7: #{textcnn_forward.1} parent=1 // pred_check_branch
      %15 = sbr.rel (0) target = $region9
    $region8: #{textcnn_forward.1} parent=1 // pred_region
      _
    $region9: #{textcnn_forward.1} parent=1 // pred_fallthru
      _
    // Predicated region
    $region10: #{textcnn_forward.1} parent=1 // pred_check
      _
    $region11: #{textcnn_forward.1} parent=1 // pred_check_branch
      %17 = sbr.rel (0) target = $region13
    $region12: #{textcnn_forward.1} parent=1 // pred_region
      _
    $region13: #{textcnn_forward.1} parent=1 // pred_fallthru
      _
    // Predicated region
    $region14: #{textcnn_forward.1} parent=1 // pred_check
      _
    $region15: #{textcnn_forward.1} parent=1 // pred_check_branch
      %19 = sbr.rel (0) target = $region17
    $region16: #{textcnn_forward.1} parent=1 // pred_region
      _
    $region17: #{textcnn_forward.1} parent=1 // pred_fallthru
      _
    // Predicated region
    $region18: #{textcnn_forward.1} parent=1 // pred_check
      _
    $region19: #{textcnn_forward.1} parent=1 // pred_check_branch
      %21 = sbr.rel (0) target = $region21
    $region20: #{textcnn_forward.1} parent=1 // pred_region
      _
    $region21: #{textcnn_forward.1} parent=1 // pred_fallthru
      _
    // Predicated region
    $region22: #{textcnn_forward.1} parent=1 // pred_check
      _
    $region23: #{textcnn_forward.1} parent=1 // pred_check_branch
      %23 = sbr.rel (0) target = $region25
    $region24: #{textcnn_forward.1} parent=1 // pred_region
      _
    $region25: #{textcnn_forward.1} parent=1 // pred_fallthru
      _
    %v24 = vlaneseq
    %v25 = vand.u32 %v24, 127
    %v26 = vadd.s32 %v25, 128
    %v27 = vld [vmem:[%s0] sm:$0xff]
    %v28 = vld [vmem:[%s0 + $0x8] sm:$0xff]
    %29 = vset.pattern.permute.xlu0 0
    %30 = vperm.xlu0 %29, %v27
    %v31 = vpop.permute.xlu0 %30
    %32 = vset.pattern.permute.xlu0 0
    %33 = vperm.xlu0 %32, %v28
    %v34 = vpop.permute.xlu0 %33
    %vm35 = vcmp.eq.s32.totalorder %v25, %v31
    %vm36 = vcmp.eq.s32.totalorder %v26, %v31
    %vm37 = vcmp.eq.s32.totalorder %v25, %v34
    %vm38 = vcmp.eq.s32.totalorder %v26, %v34
    %39 = vset.pattern.permute.xlu0 1
    %40 = vperm.xlu0 %39, %v27
    %v41 = vpop.permute.xlu0 %40
    %42 = vset.pattern.permute.xlu0 1
    %43 = vperm.xlu0 %42, %v28
    %v44 = vpop.permute.xlu0 %43
    %vm45 = vcmp.eq.s32.totalorder %v25, %v41
    %vm46 = vcmp.eq.s32.totalorder %v26, %v41
    %vm47 = vcmp.eq.s32.totalorder %v25, %v44
    %vm48 = vcmp.eq.s32.totalorder %v26, %v44
    %vm49 = vmor %vm35, %vm45
    %vm50 = vmor %vm36, %vm46
    %vm51 = vmor %vm37, %vm47
    %vm52 = vmor %vm38, %vm48
    %53 = vset.pattern.permute.xlu0 2
    %54 = vperm.xlu0 %53, %v27
    %v55 = vpop.permute.xlu0 %54
    %56 = vset.pattern.permute.xlu0 2
    %57 = vperm.xlu0 %56, %v28
    %v58 = vpop.permute.xlu0 %57
    %vm59 = vcmp.eq.s32.totalorder %v25, %v55
    %vm60 = vcmp.eq.s32.totalorder %v26, %v55
    %vm61 = vcmp.eq.s32.totalorder %v25, %v58
    %vm62 = vcmp.eq.s32.totalorder %v26, %v58
    %vm63 = vmor %vm49, %vm59
    %vm64 = vmor %vm50, %vm60
    %vm65 = vmor %vm51, %vm61
    %vm66 = vmor %vm52, %vm62
    %67 = vset.pattern.permute.xlu0 3
    %68 = vperm.xlu0 %67, %v27
    %v69 = vpop.permute.xlu0 %68
    %70 = vset.pattern.permute.xlu0 3
    %71 = vperm.xlu0 %70, %v28
    %v72 = vpop.permute.xlu0 %71
    %vm73 = vcmp.eq.s32.totalorder %v25, %v69
    %vm74 = vcmp.eq.s32.totalorder %v26, %v69
    %vm75 = vcmp.eq.s32.totalorder %v25, %v72
    %vm76 = vcmp.eq.s32.totalorder %v26, %v72
    %vm77 = vmor %vm63, %vm73
    %vm78 = vmor %vm64, %vm74
    %vm79 = vmor %vm65, %vm75
    %vm80 = vmor %vm66, %vm76
    %v81 = vsel %vm77, 1, 0
    %v82 = vsel %vm78, 1, 0
    %v83 = vsel %vm79, 1, 0
    %v84 = vsel %vm80, 1, 0
    %v85 = vcvt.s32.f32 %v81
    %v86 = vcvt.s32.f32 %v82
    %v87 = vcvt.s32.f32 %v83
    %v88 = vcvt.s32.f32 %v84
    %v89 = vld [vmem:[%s1] sm:$0xff]
    %v90 = vld [vmem:[%s1 + $0x8] sm:$0xff]
    %v91 = vld [vmem:[%s1 + $0x10] sm:$0xff]
    %v92 = vld [vmem:[%s1 + $0x18] sm:$0xff]
    %v93 = vld [vmem:[%s1 + $0x20] sm:$0xff]
    %v94 = vld [vmem:[%s1 + $0x28] sm:$0xff]
    %v95 = vld [vmem:[%s1 + $0x30] sm:$0xff]
    %v96 = vld [vmem:[%s1 + $0x38] sm:$0xff]
    %v97 = vld [vmem:[%s1 + $0x40] sm:$0xff]
    %v98 = vld [vmem:[%s1 + $0x48] sm:$0xff]
    %v99 = vld [vmem:[%s1 + $0x50] sm:$0xff]
    %v100 = vld [vmem:[%s1 + $0x58] sm:$0xff]
    %v101 = vld [vmem:[%s1 + $0x60] sm:$0xff]
    %v102 = vld [vmem:[%s1 + $0x68] sm:$0xff]
    %v103 = vld [vmem:[%s1 + $0x70] sm:$0xff]
    %v104 = vld [vmem:[%s1 + $0x78] sm:$0xff]
    %v105 = vld [vmem:[%s1 + $0x80] sm:$0xff]
    %v106 = vld [vmem:[%s1 + $0x88] sm:$0xff]
    %v107 = vld [vmem:[%s1 + $0x90] sm:$0xff]
    %v108 = vld [vmem:[%s1 + $0x98] sm:$0xff]
    %v109 = vld [vmem:[%s1 + $0xa0] sm:$0xff]
    %v110 = vld [vmem:[%s1 + $0xa8] sm:$0xff]
    %v111 = vld [vmem:[%s1 + $0xb0] sm:$0xff]
    %v112 = vld [vmem:[%s1 + $0xb8] sm:$0xff]
    %v113 = vld [vmem:[%s1 + $0xc0] sm:$0xff]
    %v114 = vld [vmem:[%s1 + $0xc8] sm:$0xff]
    %v115 = vld [vmem:[%s1 + $0xd0] sm:$0xff]
    %v116 = vld [vmem:[%s1 + $0xd8] sm:$0xff]
    %v117 = vld [vmem:[%s1 + $0xe0] sm:$0xff]
    %v118 = vld [vmem:[%s1 + $0xe8] sm:$0xff]
    %v119 = vld [vmem:[%s1 + $0xf0] sm:$0xff]
    %v120 = vld [vmem:[%s1 + $0xf8] sm:$0xff]
    %v121 = vld [vmem:[%s2] sm:$0x1]
    %v123 = vlaneseq
    %v124 = vshrl.u32 %v123, 7
    %v125 = vsub.s32 0, %v124
    %v126 = vrot.slane %v121, %v125
    %128 = vmatprep.subr.mxu0 0.0
    %129 = vmatpush1.msra.mxu0 %v104
    %130 = vmatprep.subr.mxu0 0.0
    %131 = vmatpush1.msra.mxu0 %v103
    %132 = vmatprep.subr.mxu0 0.0
    %133 = vmatpush1.msra.mxu0 %v102
    %134 = vmatprep.subr.mxu0 0.0
    %135 = vmatpush1.msra.mxu0 %v101
    %136 = vmatprep.subr.mxu0 0.0
    %137 = vmatpush1.msra.mxu0 %v100
    %138 = vmatprep.subr.mxu0 0.0
    %139 = vmatpush1.msra.mxu0 %v99
    %140 = vmatprep.subr.mxu0 0.0
    %141 = vmatpush1.msra.mxu0 %v98
    %142 = vmatprep.subr.mxu0 0.0
    %143 = vmatpush1.msra.mxu0 %v97
    %144 = vmatprep.subr.mxu0 0.0
    %145 = vmatpush1.msra.mxu0 %v96
    %146 = vmatprep.subr.mxu0 0.0
    %147 = vmatpush1.msra.mxu0 %v95
    %148 = vmatprep.subr.mxu0 0.0
    %149 = vmatpush1.msra.mxu0 %v94
    %150 = vmatprep.subr.mxu0 0.0
    %151 = vmatpush1.msra.mxu0 %v93
    %152 = vmatprep.subr.mxu0 0.0
    %153 = vmatpush1.msra.mxu0 %v92
    %154 = vmatprep.subr.mxu0 0.0
    %155 = vmatpush1.msra.mxu0 %v91
    %156 = vmatprep.subr.mxu0 0.0
    %157 = vmatpush1.msra.mxu0 %v90
    %158 = vmatprep.subr.mxu0 0.0
    %159 = vmatpush1.msra.mxu0 %v89
    %160 = vmatprep.subr.mxu0 0.0
    %161 = vmatpush2.msra.mxu0 %v120
    %162 = vmatprep.subr.mxu0 0.0
    %163 = vmatpush2.msra.mxu0 %v119
    %164 = vmatprep.subr.mxu0 0.0
    %165 = vmatpush2.msra.mxu0 %v118
    %166 = vmatprep.subr.mxu0 0.0
    %167 = vmatpush2.msra.mxu0 %v117
    %168 = vmatprep.subr.mxu0 0.0
    %169 = vmatpush2.msra.mxu0 %v116
    %170 = vmatprep.subr.mxu0 0.0
    %171 = vmatpush2.msra.mxu0 %v115
    %172 = vmatprep.subr.mxu0 0.0
    %173 = vmatpush2.msra.mxu0 %v114
    %174 = vmatprep.subr.mxu0 0.0
    %175 = vmatpush2.msra.mxu0 %v113
    %176 = vmatprep.subr.mxu0 0.0
    %177 = vmatpush2.msra.mxu0 %v112
    %178 = vmatprep.subr.mxu0 0.0
    %179 = vmatpush2.msra.mxu0 %v111
    %180 = vmatprep.subr.mxu0 0.0
    %181 = vmatpush2.msra.mxu0 %v110
    %182 = vmatprep.subr.mxu0 0.0
    %183 = vmatpush2.msra.mxu0 %v109
    %184 = vmatprep.subr.mxu0 0.0
    %185 = vmatpush2.msra.mxu0 %v108
    %186 = vmatprep.subr.mxu0 0.0
    %187 = vmatpush2.msra.mxu0 %v107
    %188 = vmatprep.subr.mxu0 0.0
    %189 = vmatpush2.msra.mxu0 %v106
    %190 = vmatprep.subr.mxu0 0.0
    %191 = vmatpush2.msra.mxu0 %v105
    %192 = vmatprep.mubr.f32.mxu0 %v86
    %193 = vmatmul.mubr.f32.gmra.mxu0 %v85
    %v194 = vpop.f32.mrf.mxu0
    %v195 = vadd.f32 %v126, %v194
    %v196 = vpop.f32.mrf.mxu0
    %197 = vmatprep.mubr.f32.mxu0 %v88
    %198 = vmatmul.mubr.f32.gmra.mxu0 %v87
    %v199 = vpop.f32.mrf.mxu0
    %v200 = vadd.f32 %v126, %v199
    %v201 = vpop.f32.mrf.mxu0
    %202 = vdwg.mxu0
    %v203 = vmax.f32 %v195, 0.0
    %v204 = vmax.f32 %v200, 0.0
    %v205 = vld [vmem:[%s3] sm:$0xff]
    %v206 = vld [vmem:[%s3 + $0x8] sm:$0xff]
    %v207 = vmul.f32 %v203, %v205
    %v208 = vmul.f32 %v204, %v206
    %vm209 = vcmask 523264
    %v210 = vsel %vm209, %v207, -inf
    %v211 = vrot.slane %v210, 4
    %v212 = vmax.f32 %v210, %v211
    %v213 = vrot.slane %v212, 2
    %v214 = vmax.f32 %v212, %v213
    %v215 = vrot.slane %v214, 1
    %v216 = vmax.f32 %v214, %v215
    %v217 = vsel %vm209, %v208, -inf
    %v218 = vrot.slane %v217, 4
    %v219 = vmax.f32 %v217, %v218
    %v220 = vrot.slane %v219, 2
    %v221 = vmax.f32 %v219, %v220
    %v222 = vrot.slane %v221, 1
    %v223 = vmax.f32 %v221, %v222
    %vm224 = vcmask 1040384
    %v225 = vsel %vm224, %v216, %v223
    %v226 = vld [vmem:[%s4] sm:$0xff]
    %v227 = vld [vmem:[%s4 + $0x8] sm:$0xff]
    %v228 = vld [vmem:[%s4 + $0x10] sm:$0xff]
    %v229 = vld [vmem:[%s4 + $0x18] sm:$0xff]
    %v230 = vld [vmem:[%s4 + $0x20] sm:$0xff]
    %v231 = vld [vmem:[%s4 + $0x28] sm:$0xff]
    %v232 = vld [vmem:[%s4 + $0x30] sm:$0xff]
    %v233 = vld [vmem:[%s4 + $0x38] sm:$0xff]
    %v234 = vld [vmem:[%s5] sm:$0x1]
    %v236 = vlaneseq
    %v237 = vshrl.u32 %v236, 7
    %v238 = vsub.s32 0, %v237
    %v239 = vrot.slane %v234, %v238
    %v242 = vsel %vm209, %v225, 0
    %244 = vmatprep.subr.mxu0 0.0
    %245 = vmatpush1.msra.mxu0 0.0
    %246 = vmatprep.subr.mxu0 0.0
    %247 = vmatpush1.msra.mxu0 0.0
    %248 = vmatprep.subr.mxu0 0.0
    %249 = vmatpush1.msra.mxu0 0.0
    %250 = vmatprep.subr.mxu0 0.0
    %251 = vmatpush1.msra.mxu0 0.0
    %252 = vmatprep.subr.mxu0 0.0
    %253 = vmatpush1.msra.mxu0 0.0
    %254 = vmatprep.subr.mxu0 0.0
    %255 = vmatpush1.msra.mxu0 0.0
    %256 = vmatprep.subr.mxu0 0.0
    %257 = vmatpush1.msra.mxu0 0.0
    %258 = vmatprep.subr.mxu0 0.0
    %259 = vmatpush1.msra.mxu0 0.0
    %260 = vmatprep.subr.mxu0 0.0
    %261 = vmatpush1.msra.mxu0 %v233
    %262 = vmatprep.subr.mxu0 0.0
    %263 = vmatpush1.msra.mxu0 %v232
    %264 = vmatprep.subr.mxu0 0.0
    %265 = vmatpush1.msra.mxu0 %v231
    %266 = vmatprep.subr.mxu0 0.0
    %267 = vmatpush1.msra.mxu0 %v230
    %268 = vmatprep.subr.mxu0 0.0
    %269 = vmatpush1.msra.mxu0 %v229
    %270 = vmatprep.subr.mxu0 0.0
    %271 = vmatpush1.msra.mxu0 %v228
    %272 = vmatprep.subr.mxu0 0.0
    %273 = vmatpush1.msra.mxu0 %v227
    %274 = vmatprep.subr.mxu0 0.0
    %275 = vmatpush1.msra.mxu0 %v226
    %276 = vmatprep.subr.mxu0 0.0
    %277 = vmatpush2.msra.mxu0 0.0
    %278 = vmatprep.subr.mxu0 0.0
    %279 = vmatpush2.msra.mxu0 0.0
    %280 = vmatprep.subr.mxu0 0.0
    %281 = vmatpush2.msra.mxu0 0.0
    %282 = vmatprep.subr.mxu0 0.0
    %283 = vmatpush2.msra.mxu0 0.0
    %284 = vmatprep.subr.mxu0 0.0
    %285 = vmatpush2.msra.mxu0 0.0
    %286 = vmatprep.subr.mxu0 0.0
    %287 = vmatpush2.msra.mxu0 0.0
    %288 = vmatprep.subr.mxu0 0.0
    %289 = vmatpush2.msra.mxu0 0.0
    %290 = vmatprep.subr.mxu0 0.0
    %291 = vmatpush2.msra.mxu0 0.0
    %292 = vmatprep.subr.mxu0 0.0
    %293 = vmatpush2.msra.mxu0 0.0
    %294 = vmatprep.subr.mxu0 0.0
    %295 = vmatpush2.msra.mxu0 0.0
    %296 = vmatprep.subr.mxu0 0.0
    %297 = vmatpush2.msra.mxu0 0.0
    %298 = vmatprep.subr.mxu0 0.0
    %299 = vmatpush2.msra.mxu0 0.0
    %300 = vmatprep.subr.mxu0 0.0
    %301 = vmatpush2.msra.mxu0 0.0
    %302 = vmatprep.subr.mxu0 0.0
    %303 = vmatpush2.msra.mxu0 0.0
    %304 = vmatprep.subr.mxu0 0.0
    %305 = vmatpush2.msra.mxu0 0.0
    %306 = vmatprep.subr.mxu0 0.0
    %307 = vmatpush2.msra.mxu0 0.0
    %308 = vmatprep.mubr.f32.mxu0 0.0
    %309 = vmatmul.mubr.f32.gmra.mxu0 %v242
    %v310 = vpop.f32.mrf.mxu0
    %v311 = vadd.f32 %v239, %v310
    %v312 = vpop.f32.mrf.mxu0
    %313 = vdwg.mxu0
    %vm314 = vcmask 33792
    %315 = vst.msk [vmem:[#allocation2] sm:$0x3] %vm314, %v311
    // Predicated region
    $region26: #{textcnn_forward.1} parent=1 // pred_check
      _
    $region27: #{textcnn_forward.1} parent=1 // pred_check_branch
      %317 = sbr.rel (0) target = $region29
    $region28: #{textcnn_forward.1} parent=1 // pred_region
      %s319 = ssub.s32 32, 32
      %320 = vsyncadd [#allocation3], %s319
      %s322 = sshll.u32 [#allocation2], 4
      %s323 = int_to_ptr.vmem [resolvable:$true] %s322
      %325 = dma.vmem_to_hbm [thread:$0]  %s323, 32, %s6, [#allocation3]
    $region29: #{textcnn_forward.1} parent=1 // pred_fallthru
      _
    // Predicated region
    $region30: #{textcnn_forward.1} parent=1 // pred_check
      _
    $region31: #{textcnn_forward.1} parent=1 // pred_check_branch
      %327 = sbr.rel (0) target = $region33
    $region32: #{textcnn_forward.1} parent=1 // pred_region
      %328 = dma.done [#allocation3], 32
    $region33: #{textcnn_forward.1} parent=1 // pred_fallthru
      _
    %329 = vsyncpa [#allocation3], 1

</llo_original>
